<compile_context>
chip_gen: v5e
topology: v5e:2x2
jax: 0.10.0
libtpu: 0.0.40
codegen_flags: <defaults>
</compile_context>

<pallas_src>
import jax
import jax.numpy as jnp
from jax.experimental import pallas as pl
from jax.experimental.pallas import tpu as pltpu

LANE = 128      # TPU lane width (last-dim alignment)
SUBLANE = 8     # TPU sublane width (second-to-last-dim alignment)
H1 = 256        # hidden dim of first Linear  (nn.Linear(feature_shape, 256))
H2 = 128        # hidden dim of second Linear (nn.Linear(256, 128))


def _round_up(n: int, m: int) -> int:
    return ((n + m - 1) // m) * m


def mlp_kernel(x_ref, w1_ref, b1_ref, w2_ref, b2_ref, w3_ref, b3_ref, o_ref):
    # ---- Linear(F_pad, 256) + ReLU ----  (f32 accumulation on the MXU)
    h1 = jnp.dot(x_ref[...], w1_ref[...], preferred_element_type=jnp.float32)
    h1 = jnp.maximum(h1 + b1_ref[...], 0.0)          # (1,256) bias broadcast, f32 VPU
    # Dropout(0.5): identity at inference.

    # ---- Linear(256, 128) + ReLU ----
    h2 = jnp.dot(h1.astype(w2_ref.dtype), w2_ref[...],
                 preferred_element_type=jnp.float32)
    h2 = jnp.maximum(h2 + b2_ref[...], 0.0)
    # Dropout(0.5): identity at inference.

    # ---- Linear(128, C_pad) ----
    out = jnp.dot(h2.astype(w3_ref.dtype), w3_ref[...],
                  preferred_element_type=jnp.float32)
    o_ref[...] = (out + b3_ref[...]).astype(o_ref.dtype)


def mlp_forward(x, params, *, block_b: int = 512,
                compute_dtype=jnp.float32,
                vmem_limit_bytes: int = 32 * 1024 * 1024):
    """x: (B, feature_shape) float32.
    params: dict with w1 (F,256), b1 (1,256), w2 (256,128), b2 (1,128),
            w3 (128,C), b3 (1,C)  -- weights stored as (in_features, out_features).
    compute_dtype: jnp.bfloat16 on v6e/v7x for 2x MXU / DMA throughput
                   (accumulation stays f32 inside the kernel)."""
    B, F = x.shape
    C = params["w3"].shape[1]

    # Lane-dense padding of the ragged dims (K of matmul-1, N of matmul-3).
    F_pad = _round_up(F, LANE)
    C_pad = _round_up(C, LANE)

    # Batch tile: big for MXU occupancy / pipelining, sublane-aligned, but never
    # larger than the (rounded) batch so tiny problems stay a single grid step.
    tb = min(_round_up(block_b, SUBLANE), _round_up(B, SUBLANE))
    B_pad = _round_up(B, tb)

    # Zero-padding: extra x columns hit zero w1 rows (no effect); extra w3 columns /
    # b3 lanes are sliced off below.
    x_p = jnp.pad(x, ((0, B_pad - B), (0, F_pad - F))).astype(compute_dtype)
    w1 = jnp.pad(params["w1"], ((0, F_pad - F), (0, 0))).astype(compute_dtype)
    w2 = params["w2"].astype(compute_dtype)
    w3 = jnp.pad(params["w3"], ((0, 0), (0, C_pad - C))).astype(compute_dtype)
    b1 = params["b1"].astype(jnp.float32)             # bias add / ReLU kept in f32
    b2 = params["b2"].astype(jnp.float32)
    b3 = jnp.pad(params["b3"], ((0, 0), (0, C_pad - C))).astype(jnp.float32)

    def resident(shape):                               # weights stay VMEM-resident
        return pl.BlockSpec(shape, lambda i: (0, 0))

    out = pl.pallas_call(
        mlp_kernel,
        out_shape=jax.ShapeDtypeStruct((B_pad, C_pad), jnp.float32),
        grid=(B_pad // tb,),
        in_specs=[
            pl.BlockSpec((tb, F_pad), lambda i: (i, 0)),   # x: tiled over batch
            resident((F_pad, H1)),
            resident((1, H1)),
            resident((H1, H2)),
            resident((1, H2)),
            resident((H2, C_pad)),
            resident((1, C_pad)),
        ],
        out_specs=pl.BlockSpec((tb, C_pad), lambda i: (i, 0)),
        compiler_params=pltpu.CompilerParams(
            dimension_semantics=("parallel",),             # megacore sharding on v7x
            vmem_limit_bytes=vmem_limit_bytes,
        ),
    )(x_p, w1, b1, w2, b2, w3, b3)

    return out[:B, :C]


def init_params(key, feature_shape, num_classes):
    """Deterministic init mimicking PyTorch Linear default (uniform +-1/sqrt(fan_in)).
    Weights stored as (in_features, out_features); biases as (1, out_features)."""
    dims = [(feature_shape, H1), (H1, H2), (H2, num_classes)]
    params = {}
    for i, (fan_in, fan_out) in enumerate(dims, start=1):
        key, kw, kb = jax.random.split(key, 3)
        bound = 1.0 / jnp.sqrt(fan_in)
        params[f"w{i}"] = jax.random.uniform(
            kw, (fan_in, fan_out), jnp.float32, minval=-bound, maxval=bound)
        params[f"b{i}"] = jax.random.uniform(
            kb, (1, fan_out), jnp.float32, minval=-bound, maxval=bound)
    return params


if __name__ == "__main__":
    key = jax.random.PRNGKey(0)
    feature_shape = 32
    num_classes = 10
    batch = 8

    kx, kp = jax.random.split(key)
    x = jax.random.normal(kx, (batch, feature_shape), jnp.float32)
    params = init_params(kp, feature_shape, num_classes)

    out = mlp_forward(x, params)
    jax.block_until_ready(out)

    # Sanity: plain-JAX reference of the same (eval-mode) forward pass.
    h1 = jnp.maximum(x @ params["w1"] + params["b1"], 0.0)
    h2 = jnp.maximum(h1 @ params["w2"] + params["b2"], 0.0)
    ref = h2 @ params["w3"] + params["b3"]
    assert out.shape == (batch, num_classes)
    assert jnp.allclose(out, ref, atol=1e-5, rtol=1e-5)

    print("KERNEL_OK")
</pallas_src>

<mosaic_0001>
module attributes {stable_mosaic.version = 11 : i64} {
  func.func @mlp_kernel(%arg0: i32, %arg1: memref<8x128xf32, #tpu.memory_space<vmem>>, %arg2: memref<128x256xf32, #tpu.memory_space<vmem>>, %arg3: memref<1x256xf32, #tpu.memory_space<vmem>>, %arg4: memref<256x128xf32, #tpu.memory_space<vmem>>, %arg5: memref<1x128xf32, #tpu.memory_space<vmem>>, %arg6: memref<128x128xf32, #tpu.memory_space<vmem>>, %arg7: memref<1x128xf32, #tpu.memory_space<vmem>>, %arg8: memref<8x128xf32, #tpu.memory_space<vmem>>) attributes {dimension_semantics = [#tpu.dimension_semantics<parallel>], iteration_bounds = array<i64: 1>, scalar_prefetch = 0 : i64, scratch_operands = 0 : i64, tpu.core_type = #tpu.core_type<tc>, window_params = [{transform_indices = @transform_0, window_bounds = array<i64: 8, 128>}, {pipeline_mode = #tpu.pipeline_mode<synchronous>, transform_indices = @transform_1, window_bounds = array<i64: 128, 256>}, {pipeline_mode = #tpu.pipeline_mode<synchronous>, transform_indices = @transform_2, window_bounds = array<i64: 1, 256>}, {pipeline_mode = #tpu.pipeline_mode<synchronous>, transform_indices = @transform_3, window_bounds = array<i64: 256, 128>}, {pipeline_mode = #tpu.pipeline_mode<synchronous>, transform_indices = @transform_4, window_bounds = array<i64: 1, 128>}, {pipeline_mode = #tpu.pipeline_mode<synchronous>, transform_indices = @transform_5, window_bounds = array<i64: 128, 128>}, {pipeline_mode = #tpu.pipeline_mode<synchronous>, transform_indices = @transform_6, window_bounds = array<i64: 1, 128>}, {transform_indices = @transform_7, window_bounds = array<i64: 8, 128>}]} {
    %c0 = arith.constant 0 : index
    %c0_0 = arith.constant 0 : index
    %0 = vector.load %arg1[%c0, %c0_0] : memref<8x128xf32, #tpu.memory_space<vmem>>, vector<8x128xf32>
    %c0_1 = arith.constant 0 : index
    %c0_2 = arith.constant 0 : index
    %1 = vector.load %arg2[%c0_1, %c0_2] : memref<128x256xf32, #tpu.memory_space<vmem>>, vector<128x256xf32>
    %cst = arith.constant dense<0.000000e+00> : vector<8x256xf32>
    %2 = tpu.matmul %0, %1, %cst {dimension_numbers = #tpu.dot_dimension_numbers<[1], [0], [0], [1], [0, 0, 1, 1], [], []>} : vector<8x128xf32>, vector<128x256xf32>, vector<8x256xf32> -> vector<8x256xf32>
    %c0_3 = arith.constant 0 : index
    %c0_4 = arith.constant 0 : index
    %3 = vector.load %arg3[%c0_3, %c0_4] : memref<1x256xf32, #tpu.memory_space<vmem>>, vector<1x256xf32>
    %4 = vector.broadcast %3 : vector<1x256xf32> to vector<8x256xf32>
    %5 = arith.addf %2, %4 : vector<8x256xf32>
    %cst_5 = arith.constant 0.000000e+00 : f32
    %6 = vector.broadcast %cst_5 : f32 to vector<8x256xf32>
    %7 = arith.maximumf %5, %6 : vector<8x256xf32>
    %c0_6 = arith.constant 0 : index
    %c0_7 = arith.constant 0 : index
    %8 = vector.load %arg4[%c0_6, %c0_7] : memref<256x128xf32, #tpu.memory_space<vmem>>, vector<256x128xf32>
    %cst_8 = arith.constant dense<0.000000e+00> : vector<8x128xf32>
    %9 = tpu.matmul %7, %8, %cst_8 {dimension_numbers = #tpu.dot_dimension_numbers<[1], [0], [0], [1], [0, 0, 1, 1], [], []>} : vector<8x256xf32>, vector<256x128xf32>, vector<8x128xf32> -> vector<8x128xf32>
    %c0_9 = arith.constant 0 : index
    %c0_10 = arith.constant 0 : index
    %10 = vector.load %arg5[%c0_9, %c0_10] : memref<1x128xf32, #tpu.memory_space<vmem>>, vector<1x128xf32>
    %11 = vector.broadcast %10 : vector<1x128xf32> to vector<8x128xf32>
    %12 = arith.addf %9, %11 : vector<8x128xf32>
    %cst_11 = arith.constant 0.000000e+00 : f32
    %13 = vector.broadcast %cst_11 : f32 to vector<8x128xf32>
    %14 = arith.maximumf %12, %13 : vector<8x128xf32>
    %c0_12 = arith.constant 0 : index
    %c0_13 = arith.constant 0 : index
    %15 = vector.load %arg6[%c0_12, %c0_13] : memref<128x128xf32, #tpu.memory_space<vmem>>, vector<128x128xf32>
    %cst_14 = arith.constant dense<0.000000e+00> : vector<8x128xf32>
    %16 = tpu.matmul %14, %15, %cst_14 {dimension_numbers = #tpu.dot_dimension_numbers<[1], [0], [0], [1], [0, 0, 1, 1], [], []>} : vector<8x128xf32>, vector<128x128xf32>, vector<8x128xf32> -> vector<8x128xf32>
    %c0_15 = arith.constant 0 : index
    %c0_16 = arith.constant 0 : index
    %17 = vector.load %arg7[%c0_15, %c0_16] : memref<1x128xf32, #tpu.memory_space<vmem>>, vector<1x128xf32>
    %18 = vector.broadcast %17 : vector<1x128xf32> to vector<8x128xf32>
    %19 = arith.addf %16, %18 : vector<8x128xf32>
    %c0_17 = arith.constant 0 : index
    %c0_18 = arith.constant 0 : index
    %20 = vector.load %arg8[%c0_17, %c0_18] : memref<8x128xf32, #tpu.memory_space<vmem>>, vector<8x128xf32>
    tpu.vector_store %arg8[%c0_17, %c0_18], %19 {strides = array<i32>} : memref<8x128xf32, #tpu.memory_space<vmem>>, vector<8x128xf32>,
    return
  }
  func.func @transform_0(%arg0: i32) -> (i32, i32) {
    %c0_i32 = arith.constant 0 : i32
    %c0_i32_0 = arith.constant 0 : i32
    return %arg0, %c0_i32 : i32, i32
  }
  func.func @transform_1(%arg0: i32) -> (i32, i32) {
    %c0_i32 = arith.constant 0 : i32
    %c0_i32_0 = arith.constant 0 : i32
    %c0_i32_1 = arith.constant 0 : i32
    return %c0_i32, %c0_i32_0 : i32, i32
  }
  func.func @transform_2(%arg0: i32) -> (i32, i32) {
    %c0_i32 = arith.constant 0 : i32
    %c0_i32_0 = arith.constant 0 : i32
    %c0_i32_1 = arith.constant 0 : i32
    return %c0_i32, %c0_i32_0 : i32, i32
  }
  func.func @transform_3(%arg0: i32) -> (i32, i32) {
    %c0_i32 = arith.constant 0 : i32
    %c0_i32_0 = arith.constant 0 : i32
    %c0_i32_1 = arith.constant 0 : i32
    return %c0_i32, %c0_i32_0 : i32, i32
  }
  func.func @transform_4(%arg0: i32) -> (i32, i32) {
    %c0_i32 = arith.constant 0 : i32
    %c0_i32_0 = arith.constant 0 : i32
    %c0_i32_1 = arith.constant 0 : i32
    return %c0_i32, %c0_i32_0 : i32, i32
  }
  func.func @transform_5(%arg0: i32) -> (i32, i32) {
    %c0_i32 = arith.constant 0 : i32
    %c0_i32_0 = arith.constant 0 : i32
    %c0_i32_1 = arith.constant 0 : i32
    return %c0_i32, %c0_i32_0 : i32, i32
  }
  func.func @transform_6(%arg0: i32) -> (i32, i32) {
    %c0_i32 = arith.constant 0 : i32
    %c0_i32_0 = arith.constant 0 : i32
    %c0_i32_1 = arith.constant 0 : i32
    return %c0_i32, %c0_i32_0 : i32, i32
  }
  func.func @transform_7(%arg0: i32) -> (i32, i32) {
    %c0_i32 = arith.constant 0 : i32
    %c0_i32_0 = arith.constant 0 : i32
    return %arg0, %c0_i32 : i32, i32
  }
}

</mosaic_0001>

<llo_original>
// kernel: tpu_custom_call.1
$region0: #{tpu_custom_call.1}
  #allocation0 [shape = 'u32[]', space=smem, size = 0x4, offset = 0x4, fixed_abs, tag = 'smem constant byte address 0x4 - core index']
  #allocation1 [shape = 'u32[72,128]{1,0:T(1,128)}', space=vmem, size = 0x9000, scoped, tag = 'internal scratch']
  %s0 = inlined_call_operand.hbm [shape: f32[8,128], index: 0, kind: input, shape index: {}]
  %s1 = inlined_call_operand.hbm [shape: f32[128,256], index: 1, kind: input, shape index: {}]
  %s2 = inlined_call_operand.hbm [shape: f32[1,256], index: 2, kind: input, shape index: {}]
  %s3 = inlined_call_operand.hbm [shape: f32[256,128], index: 3, kind: input, shape index: {}]
  %s4 = inlined_call_operand.vmem [shape: f32[1,128], index: 4, kind: input, shape index: {}]
  %s5 = inlined_call_operand.hbm [shape: f32[128,128], index: 5, kind: input, shape index: {}]
  %s6 = inlined_call_operand.vmem [shape: f32[1,128], index: 6, kind: input, shape index: {}]
  %s7 = inlined_call_operand.hbm [shape: f32[8,128], index: 7, kind: output, shape index: {}]
  %s8 = sld [smem:[#allocation0]]
  $region58: #{tpu_custom_call.1} parent=0
    _
  %s10 = ssub.s32 1, %s8
  %s11 = scalar_select 0, %s10, %s8
  $region1: #{tpu_custom_call.1} parent=0
    #allocation2 [shape = 'u8[4096]{0}', space=vmem, size = 0x1000, scoped, tag = 'input window, operand 0, single buffered']
    #allocation3 [shape = 's32[1]{0}', space=sflag, size = 0x4, scoped, tag = 'scoped memory for tpu_custom_call.1']
    #allocation4 [shape = 's32[1]{0}', space=sflag, size = 0x4, scoped, tag = 'scoped memory for tpu_custom_call.1']
    #allocation5 [shape = 'u8[131072]{0}', space=vmem, size = 0x20000, scoped, tag = 'input window, operand 1, single buffered']
    #allocation6 [shape = 's32[1]{0}', space=sflag, size = 0x4, scoped, tag = 'scoped memory for tpu_custom_call.1']
    #allocation7 [shape = 'u8[1024]{0}', space=vmem, size = 0x400, scoped, tag = 'input window, operand 2, single buffered']
    #allocation8 [shape = 'u8[131072]{0}', space=vmem, size = 0x20000, scoped, tag = 'input window, operand 3, single buffered']
    #allocation9 [shape = 's32[1]{0}', space=sflag, size = 0x4, scoped, tag = 'scoped memory for tpu_custom_call.1']
    #allocation10 [shape = 'u8[65536]{0}', space=vmem, size = 0x10000, scoped, tag = 'input window, operand 5, single buffered']
    #allocation11 [shape = 'u8[4096]{0}', space=vmem, size = 0x1000, scoped, tag = 'output window, operand 0, single buffered']
    %12 = vsyncpa [#allocation3], 0
    %13 = vsyncpa [#allocation6], 0
    %14 = vsyncpa [#allocation9], 0
    %15 = vsyncpa [#allocation4], 0
    // Predicated region
    $region2: #{tpu_custom_call.1} parent=1 // pred_check
      _
    $region3: #{tpu_custom_call.1} parent=1 // pred_check_branch
      %17 = sbr.rel (0) target = $region5
    $region4: #{tpu_custom_call.1} parent=1 // pred_region
      %19 = vsyncadd [#allocation3], 0
      %s21 = sshll.u32 %s0, 4
      %s22 = int_to_ptr.hbm [resolvable:$true] %s21
      %s23 = sshll.u32 [#allocation2], 4
      %s24 = int_to_ptr.vmem [resolvable:$true] %s23
      %26 = dma.hbm_to_vmem [thread:$0]  %s22, 128, %s24, [#allocation3]
    $region5: #{tpu_custom_call.1} parent=1 // pred_fallthru
      _
    // Predicated region
    $region6: #{tpu_custom_call.1} parent=1 // pred_check
      _
    $region7: #{tpu_custom_call.1} parent=1 // pred_check_branch
      %28 = sbr.rel (0) target = $region9
    $region8: #{tpu_custom_call.1} parent=1 // pred_region
      %30 = vsyncadd [#allocation6], 0
      %s31 = sshll.u32 %s1, 4
      %s32 = int_to_ptr.hbm [resolvable:$true] %s31
      %s33 = sshll.u32 [#allocation5], 4
      %s34 = int_to_ptr.vmem [resolvable:$true] %s33
      %39 = dma.hbm_to_vmem [thread:$0]  %s32, 4096, %s34, [#allocation6], 256, 256, 16
    $region9: #{tpu_custom_call.1} parent=1 // pred_fallthru
      _
    // Predicated region
    $region10: #{tpu_custom_call.1} parent=1 // pred_check
      _
    $region11: #{tpu_custom_call.1} parent=1 // pred_check_branch
      %41 = sbr.rel (0) target = $region13
    $region12: #{tpu_custom_call.1} parent=1 // pred_region
      %43 = vsyncadd [#allocation6], 0
      %s45 = sshll.u32 %s2, 4
      %s46 = int_to_ptr.hbm [resolvable:$true] %s45
      %s47 = sshll.u32 [#allocation7], 4
      %s48 = int_to_ptr.vmem [resolvable:$true] %s47
      %50 = dma.hbm_to_vmem [thread:$0]  %s46, 32, %s48, [#allocation6]
    $region13: #{tpu_custom_call.1} parent=1 // pred_fallthru
      _
    // Predicated region
    $region14: #{tpu_custom_call.1} parent=1 // pred_check
      _
    $region15: #{tpu_custom_call.1} parent=1 // pred_check_branch
      %52 = sbr.rel (0) target = $region17
    $region16: #{tpu_custom_call.1} parent=1 // pred_region
      %54 = vsyncadd [#allocation9], 0
      %s55 = sshll.u32 %s3, 4
      %s56 = int_to_ptr.hbm [resolvable:$true] %s55
      %s57 = sshll.u32 [#allocation8], 4
      %s58 = int_to_ptr.vmem [resolvable:$true] %s57
      %63 = dma.hbm_to_vmem [thread:$0]  %s56, 4096, %s58, [#allocation9], 128, 128, 8
    $region17: #{tpu_custom_call.1} parent=1 // pred_fallthru
      _
    // Predicated region
    $region18: #{tpu_custom_call.1} parent=1 // pred_check
      _
    $region19: #{tpu_custom_call.1} parent=1 // pred_check_branch
      %65 = sbr.rel (0) target = $region21
    $region20: #{tpu_custom_call.1} parent=1 // pred_region
      _
    $region21: #{tpu_custom_call.1} parent=1 // pred_fallthru
      _
    // Predicated region
    $region22: #{tpu_custom_call.1} parent=1 // pred_check
      _
    $region23: #{tpu_custom_call.1} parent=1 // pred_check_branch
      %67 = sbr.rel (0) target = $region25
    $region24: #{tpu_custom_call.1} parent=1 // pred_region
      %69 = vsyncadd [#allocation9], 0
      %s70 = sshll.u32 %s5, 4
      %s71 = int_to_ptr.hbm [resolvable:$true] %s70
      %s72 = sshll.u32 [#allocation10], 4
      %s73 = int_to_ptr.vmem [resolvable:$true] %s72
      %78 = dma.hbm_to_vmem [thread:$0]  %s71, 2048, %s73, [#allocation9], 128, 128, 8
    $region25: #{tpu_custom_call.1} parent=1 // pred_fallthru
      _
    // Predicated region
    $region26: #{tpu_custom_call.1} parent=1 // pred_check
      _
    $region27: #{tpu_custom_call.1} parent=1 // pred_check_branch
      %80 = sbr.rel (0) target = $region29
    $region28: #{tpu_custom_call.1} parent=1 // pred_region
      _
    $region29: #{tpu_custom_call.1} parent=1 // pred_fallthru
      _
    // Predicated region
    $region30: #{tpu_custom_call.1} parent=1 // pred_check
      _
    $region31: #{tpu_custom_call.1} parent=1 // pred_check_branch
      %82 = sbr.rel (0) target = $region33
    $region32: #{tpu_custom_call.1} parent=1 // pred_region
      %84 = dma.done [#allocation3], 128
    $region33: #{tpu_custom_call.1} parent=1 // pred_fallthru
      _
    // Predicated region
    $region34: #{tpu_custom_call.1} parent=1 // pred_check
      _
    $region35: #{tpu_custom_call.1} parent=1 // pred_check_branch
      %86 = sbr.rel (0) target = $region37
    $region36: #{tpu_custom_call.1} parent=1 // pred_region
      %88 = dma.done [#allocation6], 4096
    $region37: #{tpu_custom_call.1} parent=1 // pred_fallthru
      _
    // Predicated region
    $region38: #{tpu_custom_call.1} parent=1 // pred_check
      _
    $region39: #{tpu_custom_call.1} parent=1 // pred_check_branch
      %90 = sbr.rel (0) target = $region41
    $region40: #{tpu_custom_call.1} parent=1 // pred_region
      %92 = dma.done [#allocation6], 32
    $region41: #{tpu_custom_call.1} parent=1 // pred_fallthru
      _
    // Predicated region
    $region42: #{tpu_custom_call.1} parent=1 // pred_check
      _
    $region43: #{tpu_custom_call.1} parent=1 // pred_check_branch
      %94 = sbr.rel (0) target = $region45
    $region44: #{tpu_custom_call.1} parent=1 // pred_region
      %96 = dma.done [#allocation9], 4096
    $region45: #{tpu_custom_call.1} parent=1 // pred_fallthru
      _
    // Predicated region
    $region46: #{tpu_custom_call.1} parent=1 // pred_check
      _
    $region47: #{tpu_custom_call.1} parent=1 // pred_check_branch
      %98 = sbr.rel (0) target = $region49
    $region48: #{tpu_custom_call.1} parent=1 // pred_region
      %100 = dma.done [#allocation9], 2048
    $region49: #{tpu_custom_call.1} parent=1 // pred_fallthru
      _
    %v101 = vld [vmem:[#allocation2] sm:$0xff]
    %v102 = vld [vmem:[#allocation5] sm:$0xff]
    %v103 = vld [vmem:[#allocation5 + $0x8] sm:$0xff]
    %v104 = vld [vmem:[#allocation5 + $0x10] sm:$0xff]
    %v105 = vld [vmem:[#allocation5 + $0x18] sm:$0xff]
    %v106 = vld [vmem:[#allocation5 + $0x20] sm:$0xff]
    %v107 = vld [vmem:[#allocation5 + $0x28] sm:$0xff]
    %v108 = vld [vmem:[#allocation5 + $0x30] sm:$0xff]
    %v109 = vld [vmem:[#allocation5 + $0x38] sm:$0xff]
    %v110 = vld [vmem:[#allocation5 + $0x40] sm:$0xff]
    %v111 = vld [vmem:[#allocation5 + $0x48] sm:$0xff]
    %v112 = vld [vmem:[#allocation5 + $0x50] sm:$0xff]
    %v113 = vld [vmem:[#allocation5 + $0x58] sm:$0xff]
    %v114 = vld [vmem:[#allocation5 + $0x60] sm:$0xff]
    %v115 = vld [vmem:[#allocation5 + $0x68] sm:$0xff]
    %v116 = vld [vmem:[#allocation5 + $0x70] sm:$0xff]
    %v117 = vld [vmem:[#allocation5 + $0x78] sm:$0xff]
    %v118 = vld [vmem:[#allocation5 + $0x80] sm:$0xff]
    %v119 = vld [vmem:[#allocation5 + $0x88] sm:$0xff]
    %v120 = vld [vmem:[#allocation5 + $0x90] sm:$0xff]
    %v121 = vld [vmem:[#allocation5 + $0x98] sm:$0xff]
    %v122 = vld [vmem:[#allocation5 + $0xa0] sm:$0xff]
    %v123 = vld [vmem:[#allocation5 + $0xa8] sm:$0xff]
    %v124 = vld [vmem:[#allocation5 + $0xb0] sm:$0xff]
    %v125 = vld [vmem:[#allocation5 + $0xb8] sm:$0xff]
    %v126 = vld [vmem:[#allocation5 + $0xc0] sm:$0xff]
    %v127 = vld [vmem:[#allocation5 + $0xc8] sm:$0xff]
    %v128 = vld [vmem:[#allocation5 + $0xd0] sm:$0xff]
    %v129 = vld [vmem:[#allocation5 + $0xd8] sm:$0xff]
    %v130 = vld [vmem:[#allocation5 + $0xe0] sm:$0xff]
    %v131 = vld [vmem:[#allocation5 + $0xe8] sm:$0xff]
    %v132 = vld [vmem:[#allocation5 + $0xf0] sm:$0xff]
    %v133 = vld [vmem:[#allocation5 + $0xf8] sm:$0xff]
    %v134 = vld [vmem:[#allocation7] sm:$0x3]
    %v136 = vperm.slane %v134, 0
    %v137 = vperm.slane %v134, 1
    %140 = vmatpush.msra.mxu0 %v132
    %141 = vmatpush.msra.mxu0 %v130
    %142 = vmatpush.msra.mxu0 %v128
    %143 = vmatpush.msra.mxu0 %v126
    %144 = vmatpush.msra.mxu0 %v124
    %145 = vmatpush.msra.mxu0 %v122
    %146 = vmatpush.msra.mxu0 %v120
    %147 = vmatpush.msra.mxu0 %v118
    %148 = vmatpush.msra.mxu0 %v116
    %149 = vmatpush.msra.mxu0 %v114
    %150 = vmatpush.msra.mxu0 %v112
    %151 = vmatpush.msra.mxu0 %v110
    %152 = vmatpush.msra.mxu0 %v108
    %153 = vmatpush.msra.mxu0 %v106
    %154 = vmatpush.msra.mxu0 %v104
    %155 = vmatpush.msra.mxu0 %v102
    %156 = vmatmul.f32.gmra.mxu0 %v101
    %v157 = vpop.f32.mrf.mxu0
    %v158 = vadd.f32 %v136, %v157
    %159 = vdwg.mxu0
    %160 = vmatpush.msra.mxu0 %v133
    %161 = vmatpush.msra.mxu0 %v131
    %162 = vmatpush.msra.mxu0 %v129
    %163 = vmatpush.msra.mxu0 %v127
    %164 = vmatpush.msra.mxu0 %v125
    %165 = vmatpush.msra.mxu0 %v123
    %166 = vmatpush.msra.mxu0 %v121
    %167 = vmatpush.msra.mxu0 %v119
    %168 = vmatpush.msra.mxu0 %v117
    %169 = vmatpush.msra.mxu0 %v115
    %170 = vmatpush.msra.mxu0 %v113
    %171 = vmatpush.msra.mxu0 %v111
    %172 = vmatpush.msra.mxu0 %v109
    %173 = vmatpush.msra.mxu0 %v107
    %174 = vmatpush.msra.mxu0 %v105
    %175 = vmatpush.msra.mxu0 %v103
    %176 = vmatmul.f32.gmra.mxu0 %v101
    %v177 = vpop.f32.mrf.mxu0
    %v178 = vadd.f32 %v137, %v177
    %179 = vdwg.mxu0
    %v180 = vmax.f32 %v158, 0.0
    %v181 = vmax.f32 %v178, 0.0
    %v182 = vld [vmem:[#allocation8] sm:$0xff]
    %v183 = vld [vmem:[#allocation8 + $0x8] sm:$0xff]
    %v184 = vld [vmem:[#allocation8 + $0x10] sm:$0xff]
    %v185 = vld [vmem:[#allocation8 + $0x18] sm:$0xff]
    %v186 = vld [vmem:[#allocation8 + $0x20] sm:$0xff]
    %v187 = vld [vmem:[#allocation8 + $0x28] sm:$0xff]
    %v188 = vld [vmem:[#allocation8 + $0x30] sm:$0xff]
    %v189 = vld [vmem:[#allocation8 + $0x38] sm:$0xff]
    %v190 = vld [vmem:[#allocation8 + $0x40] sm:$0xff]
    %v191 = vld [vmem:[#allocation8 + $0x48] sm:$0xff]
    %v192 = vld [vmem:[#allocation8 + $0x50] sm:$0xff]
    %v193 = vld [vmem:[#allocation8 + $0x58] sm:$0xff]
    %v194 = vld [vmem:[#allocation8 + $0x60] sm:$0xff]
    %v195 = vld [vmem:[#allocation8 + $0x68] sm:$0xff]
    %v196 = vld [vmem:[#allocation8 + $0x70] sm:$0xff]
    %v197 = vld [vmem:[#allocation8 + $0x78] sm:$0xff]
    %v198 = vld [vmem:[#allocation8 + $0x80] sm:$0xff]
    %v199 = vld [vmem:[#allocation8 + $0x88] sm:$0xff]
    %v200 = vld [vmem:[#allocation8 + $0x90] sm:$0xff]
    %v201 = vld [vmem:[#allocation8 + $0x98] sm:$0xff]
    %v202 = vld [vmem:[#allocation8 + $0xa0] sm:$0xff]
    %v203 = vld [vmem:[#allocation8 + $0xa8] sm:$0xff]
    %v204 = vld [vmem:[#allocation8 + $0xb0] sm:$0xff]
    %v205 = vld [vmem:[#allocation8 + $0xb8] sm:$0xff]
    %v206 = vld [vmem:[#allocation8 + $0xc0] sm:$0xff]
    %v207 = vld [vmem:[#allocation8 + $0xc8] sm:$0xff]
    %v208 = vld [vmem:[#allocation8 + $0xd0] sm:$0xff]
    %v209 = vld [vmem:[#allocation8 + $0xd8] sm:$0xff]
    %v210 = vld [vmem:[#allocation8 + $0xe0] sm:$0xff]
    %v211 = vld [vmem:[#allocation8 + $0xe8] sm:$0xff]
    %v212 = vld [vmem:[#allocation8 + $0xf0] sm:$0xff]
    %v213 = vld [vmem:[#allocation8 + $0xf8] sm:$0xff]
    %v214 = vld [vmem:[%s4] sm:$0x1]
    %v216 = vperm.slane %v214, 0
    %218 = vmatpush.msra.mxu0 %v197
    %219 = vmatpush.msra.mxu0 %v196
    %220 = vmatpush.msra.mxu0 %v195
    %221 = vmatpush.msra.mxu0 %v194
    %222 = vmatpush.msra.mxu0 %v193
    %223 = vmatpush.msra.mxu0 %v192
    %224 = vmatpush.msra.mxu0 %v191
    %225 = vmatpush.msra.mxu0 %v190
    %226 = vmatpush.msra.mxu0 %v189
    %227 = vmatpush.msra.mxu0 %v188
    %228 = vmatpush.msra.mxu0 %v187
    %229 = vmatpush.msra.mxu0 %v186
    %230 = vmatpush.msra.mxu0 %v185
    %231 = vmatpush.msra.mxu0 %v184
    %232 = vmatpush.msra.mxu0 %v183
    %233 = vmatpush.msra.mxu0 %v182
    %234 = vmatmul.f32.gmra.mxu0 %v180
    %v235 = vpop.f32.mrf.mxu0
    %v236 = vadd.f32 %v216, %v235
    %237 = vdwg.mxu0
    %238 = vmatpush.msra.mxu0 %v213
    %239 = vmatpush.msra.mxu0 %v212
    %240 = vmatpush.msra.mxu0 %v211
    %241 = vmatpush.msra.mxu0 %v210
    %242 = vmatpush.msra.mxu0 %v209
    %243 = vmatpush.msra.mxu0 %v208
    %244 = vmatpush.msra.mxu0 %v207
    %245 = vmatpush.msra.mxu0 %v206
    %246 = vmatpush.msra.mxu0 %v205
    %247 = vmatpush.msra.mxu0 %v204
    %248 = vmatpush.msra.mxu0 %v203
    %249 = vmatpush.msra.mxu0 %v202
    %250 = vmatpush.msra.mxu0 %v201
    %251 = vmatpush.msra.mxu0 %v200
    %252 = vmatpush.msra.mxu0 %v199
    %253 = vmatpush.msra.mxu0 %v198
    %254 = vmatmul.f32.gmra.mxu0 %v181
    %v255 = vpop.f32.mrf.mxu0
    %v256 = vadd.f32 %v236, %v255
    %257 = vdwg.mxu0
    %v258 = vmax.f32 %v256, 0.0
    %v259 = vld [vmem:[#allocation10] sm:$0xff]
    %v260 = vld [vmem:[#allocation10 + $0x8] sm:$0xff]
    %v261 = vld [vmem:[#allocation10 + $0x10] sm:$0xff]
    %v262 = vld [vmem:[#allocation10 + $0x18] sm:$0xff]
    %v263 = vld [vmem:[#allocation10 + $0x20] sm:$0xff]
    %v264 = vld [vmem:[#allocation10 + $0x28] sm:$0xff]
    %v265 = vld [vmem:[#allocation10 + $0x30] sm:$0xff]
    %v266 = vld [vmem:[#allocation10 + $0x38] sm:$0xff]
    %v267 = vld [vmem:[#allocation10 + $0x40] sm:$0xff]
    %v268 = vld [vmem:[#allocation10 + $0x48] sm:$0xff]
    %v269 = vld [vmem:[#allocation10 + $0x50] sm:$0xff]
    %v270 = vld [vmem:[#allocation10 + $0x58] sm:$0xff]
    %v271 = vld [vmem:[#allocation10 + $0x60] sm:$0xff]
    %v272 = vld [vmem:[#allocation10 + $0x68] sm:$0xff]
    %v273 = vld [vmem:[#allocation10 + $0x70] sm:$0xff]
    %v274 = vld [vmem:[#allocation10 + $0x78] sm:$0xff]
    %v275 = vld [vmem:[%s6] sm:$0x1]
    %v277 = vperm.slane %v275, 0
    %279 = vmatpush.msra.mxu0 %v274
    %280 = vmatpush.msra.mxu0 %v273
    %281 = vmatpush.msra.mxu0 %v272
    %282 = vmatpush.msra.mxu0 %v271
    %283 = vmatpush.msra.mxu0 %v270
    %284 = vmatpush.msra.mxu0 %v269
    %285 = vmatpush.msra.mxu0 %v268
    %286 = vmatpush.msra.mxu0 %v267
    %287 = vmatpush.msra.mxu0 %v266
    %288 = vmatpush.msra.mxu0 %v265
    %289 = vmatpush.msra.mxu0 %v264
    %290 = vmatpush.msra.mxu0 %v263
    %291 = vmatpush.msra.mxu0 %v262
    %292 = vmatpush.msra.mxu0 %v261
    %293 = vmatpush.msra.mxu0 %v260
    %294 = vmatpush.msra.mxu0 %v259
    %295 = vmatmul.f32.gmra.mxu0 %v258
    %v296 = vpop.f32.mrf.mxu0
    %v297 = vadd.f32 %v277, %v296
    %298 = vdwg.mxu0
    %299 = vst [vmem:[#allocation11] sm:$0xff] %v297
    // Predicated region
    $region50: #{tpu_custom_call.1} parent=1 // pred_check
      _
    $region51: #{tpu_custom_call.1} parent=1 // pred_check_branch
      %301 = sbr.rel (0) target = $region53
    $region52: #{tpu_custom_call.1} parent=1 // pred_region
      %303 = vsyncadd [#allocation4], 0
      %s305 = sshll.u32 [#allocation11], 4
      %s306 = int_to_ptr.vmem [resolvable:$true] %s305
      %s307 = sshll.u32 %s7, 4
      %s308 = int_to_ptr.hbm [resolvable:$true] %s307
      %310 = dma.vmem_to_hbm [thread:$0]  %s306, 128, %s308, [#allocation4]
    $region53: #{tpu_custom_call.1} parent=1 // pred_fallthru
      _
    // Predicated region
    $region54: #{tpu_custom_call.1} parent=1 // pred_check
      _
    $region55: #{tpu_custom_call.1} parent=1 // pred_check_branch
      %312 = sbr.rel (0) target = $region57
    $region56: #{tpu_custom_call.1} parent=1 // pred_region
      %314 = dma.done [#allocation4], 128
    $region57: #{tpu_custom_call.1} parent=1 // pred_fallthru
      _
    %315 = vsyncpa [#allocation3], 1
    %316 = vsyncpa [#allocation6], 1
    %317 = vsyncpa [#allocation9], 1
    %318 = vsyncpa [#allocation4], 1

</llo_original>
